<compile_context>
chip_gen: v7x
topology: tpu7x:2x2x1
jax: 0.10.0
libtpu: 0.0.40
codegen_flags: <defaults>
</compile_context>

<pallas_src>
import functools

import jax
import jax.numpy as jnp
from jax.experimental import pallas as pl
from jax.experimental.pallas import tpu as pltpu


def _to_sample_coords_kernel(lines_ref, out_ref, *, sample_rate):
    # lines_ref / out_ref: (2, TILE_N) float32 in VMEM.
    #   row 0 = onsets  (seconds) -> ceil (onset  * sample_rate)
    #   row 1 = offsets (seconds) -> floor(offset * sample_rate)
    scaled = lines_ref[...] * jnp.float32(sample_rate)
    row = jax.lax.broadcasted_iota(jnp.int32, scaled.shape, dimension=0)
    out_ref[...] = jnp.where(row == 0, jnp.ceil(scaled), jnp.floor(scaled))


def to_sample_coords(x, lines=None, labels=None, *, sample_rate=16000,
                     max_tile_n=512):
    """Pallas equivalent of ToSampleCoords.forward -> (x, new_lines, labels)."""
    if lines is None:
        return x, None, labels

    lines_arr = jnp.asarray(lines, dtype=jnp.float32)
    assert lines_arr.ndim == 2 and lines_arr.shape[1] == 2, lines_arr.shape
    n = lines_arr.shape[0]
    if n == 0:
        return x, lines_arr, labels

    # Lane-dense layout: annotation index on lanes, (onset, offset) on sublanes.
    lt = lines_arr.T  # (2, N)

    # Tile the lane axis; pad N to a multiple of the tile (multiple of 128).
    tile_n = min(max_tile_n, ((n + 127) // 128) * 128)
    padded_n = pl.cdiv(n, tile_n) * tile_n
    if padded_n != n:
        lt = jnp.pad(lt, ((0, 0), (0, padded_n - n)))

    grid = (padded_n // tile_n,)
    kernel = functools.partial(_to_sample_coords_kernel, sample_rate=sample_rate)

    itemsize = 4
    cost = pl.CostEstimate(
        flops=4 * padded_n,                       # mul + select, 2 rows
        transcendentals=0,
        bytes_accessed=2 * 2 * padded_n * itemsize,  # read + write (2, N) f32
    )

    out_t = pl.pallas_call(
        kernel,
        out_shape=jax.ShapeDtypeStruct((2, padded_n), jnp.float32),
        grid_spec=pltpu.PrefetchScalarGridSpec(
            num_scalar_prefetch=0,
            grid=grid,
            in_specs=[pl.BlockSpec((2, tile_n), lambda i: (0, i))],
            out_specs=pl.BlockSpec((2, tile_n), lambda i: (0, i)),
        ),
        compiler_params=pltpu.CompilerParams(
            dimension_semantics=("parallel",),
        ),
        cost_estimate=cost,
    )(lt)

    new_lines = out_t[:, :n].T  # back to (N, 2)
    return x, new_lines, labels


class ToSampleCoords:
    """Mirror of the PyTorch module's interface (sample rate comes from cfg)."""

    def __init__(self, cfg=None):
        self.sample_rate = 16000
        if cfg is not None and hasattr(cfg, "SAMPLE_RATE"):
            self.sample_rate = cfg.SAMPLE_RATE

    def __call__(self, x, lines=None, labels=None):
        return to_sample_coords(x, lines, labels, sample_rate=self.sample_rate)


if __name__ == "__main__":
    key = jax.random.PRNGKey(0)
    k_x, k_on, k_dur = jax.random.split(key, 3)

    # Pass-through tensor (this transform leaves x untouched).
    x = jax.random.normal(k_x, (2, 4, 16, 16), dtype=jnp.float32)

    # 8 annotations: [onset_sec, offset_sec], offset = onset + duration.
    n_ann = 8
    onsets = jax.random.uniform(k_on, (n_ann,), minval=0.0, maxval=2.0,
                                dtype=jnp.float32)
    durs = jax.random.uniform(k_dur, (n_ann,), minval=0.05, maxval=0.5,
                              dtype=jnp.float32)
    lines = jnp.stack([onsets, onsets + durs], axis=1)  # (N, 2)

    class Cfg:
        SAMPLE_RATE = 16000

    module = ToSampleCoords(Cfg())
    x_out, new_lines, labels_out = module(x, lines, labels=None)
    new_lines = jax.block_until_ready(new_lines)

    sr = 16000.0
    ref = jnp.stack([jnp.ceil(lines[:, 0] * sr),
                     jnp.floor(lines[:, 1] * sr)], axis=1)
    assert x_out is x, "x must pass through unchanged"
    assert labels_out is None
    assert new_lines.shape == (n_ann, 2), new_lines.shape
    assert jnp.allclose(new_lines, ref, atol=0.0), "mismatch vs reference"

    # Multi-tile case (exercises the grid / parallel path and padding).
    n_big = 1000
    on2 = jax.random.uniform(jax.random.PRNGKey(1), (n_big,),
                             minval=0.0, maxval=10.0, dtype=jnp.float32)
    lines2 = jnp.stack([on2, on2 + jnp.float32(0.25)], axis=1)
    _, new2, _ = to_sample_coords(x, lines2, None, sample_rate=8000)
    new2 = jax.block_until_ready(new2)
    ref2 = jnp.stack([jnp.ceil(lines2[:, 0] * 8000.0),
                      jnp.floor(lines2[:, 1] * 8000.0)], axis=1)
    assert new2.shape == (n_big, 2), new2.shape
    assert jnp.allclose(new2, ref2, atol=0.0), "multi-tile mismatch vs reference"

    print("KERNEL_OK")
</pallas_src>

<mosaic_0001>
module attributes {stable_mosaic.version = 11 : i64} {
  func.func @_to_sample_coords_kernel(%arg0: i32, %arg1: memref<2x128xf32, #tpu.memory_space<vmem>>, %arg2: memref<2x128xf32, #tpu.memory_space<vmem>>) attributes {dimension_semantics = [#tpu.dimension_semantics<parallel>], iteration_bounds = array<i64: 1>, scalar_prefetch = 0 : i64, scratch_operands = 0 : i64, tpu.core_type = #tpu.core_type<tc>, window_params = [{transform_indices = @transform_0, window_bounds = array<i64: 2, 128>}, {transform_indices = @transform_1, window_bounds = array<i64: 2, 128>}]} {
    %c0 = arith.constant 0 : index
    %c0_0 = arith.constant 0 : index
    %0 = vector.load %arg1[%c0, %c0_0] : memref<2x128xf32, #tpu.memory_space<vmem>>, vector<2x128xf32>
    %cst = arith.constant 1.600000e+04 : f32
    %1 = vector.broadcast %cst : f32 to vector<2x128xf32>
    %2 = arith.mulf %0, %1 : vector<2x128xf32>
    %3 = tpu.iota {dimensions = array<i32: 0>} : vector<2x128xi32>
    %c0_i32 = arith.constant 0 : i32
    %4 = vector.broadcast %c0_i32 : i32 to vector<2x128xi32>
    %5 = arith.cmpi eq, %3, %4 : vector<2x128xi32>
    %6 = math.ceil %2 : vector<2x128xf32>
    %7 = math.floor %2 : vector<2x128xf32>
    %8 = arith.select %5, %6, %7 : vector<2x128xi1>, vector<2x128xf32>
    %c0_1 = arith.constant 0 : index
    %c0_2 = arith.constant 0 : index
    %9 = vector.load %arg2[%c0_1, %c0_2] : memref<2x128xf32, #tpu.memory_space<vmem>>, vector<2x128xf32>
    tpu.vector_store %arg2[%c0_1, %c0_2], %8 {strides = array<i32>} : memref<2x128xf32, #tpu.memory_space<vmem>>, vector<2x128xf32>,
    return
  }
  func.func @transform_0(%arg0: i32) -> (i32, i32) {
    %c0_i32 = arith.constant 0 : i32
    %c0_i32_0 = arith.constant 0 : i32
    return %c0_i32, %arg0 : i32, i32
  }
  func.func @transform_1(%arg0: i32) -> (i32, i32) {
    %c0_i32 = arith.constant 0 : i32
    %c0_i32_0 = arith.constant 0 : i32
    return %c0_i32, %arg0 : i32, i32
  }
}

</mosaic_0001>

<llo_original>
// kernel: tpu_custom_call.1
$region0: #{tpu_custom_call.1}
  #allocation0 [shape = 'u32[]', space=smem, size = 0x4, offset = 0x4, fixed_abs, tag = 'smem constant byte address 0x4 - core index']
  #allocation1 [shape = 'u32[144,128]{1,0:T(1,128)}', space=vmem, size = 0x12000, scoped, tag = 'internal scratch']
  %s0 = inlined_call_operand.hbm [shape: f32[2,128], index: 0, kind: input, shape index: {}]
  %s1 = inlined_call_operand.hbm [shape: f32[2,128], index: 1, kind: output, shape index: {}]
  %s2 = sld [smem:[#allocation0]]
  $region18: #{tpu_custom_call.1} parent=0
    _
  %s4 = ssub.s32 1, %s2
  %s5 = scalar_select 0, %s4, %s2
  $region1: #{tpu_custom_call.1} parent=0
    #allocation2 [shape = 'u8[1024]{0}', space=vmem, size = 0x400, scoped, tag = 'input window, operand 0, single buffered']
    #allocation3 [shape = 's32[1]{0}', space=sflag, size = 0x4, scoped, tag = 'scoped memory for tpu_custom_call.1']
    #allocation4 [shape = 's32[1]{0}', space=sflag, size = 0x4, scoped, tag = 'scoped memory for tpu_custom_call.1']
    #allocation5 [shape = 'u8[1024]{0}', space=vmem, size = 0x400, scoped, tag = 'output window, operand 0, single buffered']
    %6 = vsyncpa [#allocation3], 0
    %7 = vsyncpa [#allocation4], 0
    // Predicated region
    $region2: #{tpu_custom_call.1} parent=1 // pred_check
      _
    $region3: #{tpu_custom_call.1} parent=1 // pred_check_branch
      %9 = sbr.rel (0) target = $region5
    $region4: #{tpu_custom_call.1} parent=1 // pred_region
      %s11 = ssub.s32 32, 32
      %12 = vsyncadd [#allocation3], %s11
      %s14 = sshll.u32 [#allocation2], 4
      %s15 = int_to_ptr.vmem [resolvable:$true] %s14
      %17 = dma.hbm_to_vmem [thread:$0]  %s0, 32, %s15, [#allocation3]
    $region5: #{tpu_custom_call.1} parent=1 // pred_fallthru
      _
    // Predicated region
    $region6: #{tpu_custom_call.1} parent=1 // pred_check
      _
    $region7: #{tpu_custom_call.1} parent=1 // pred_check_branch
      %19 = sbr.rel (0) target = $region9
    $region8: #{tpu_custom_call.1} parent=1 // pred_region
      %20 = dma.done [#allocation3], 32
    $region9: #{tpu_custom_call.1} parent=1 // pred_fallthru
      _
    %v21 = vld [vmem:[#allocation2] sm:$0x3]
    %v22 = vmul.f32 %v21, 16000.0
    %v23 = vlaneseq
    %v24 = vshrl.u32 %v23, 7
    %vm25 = vcmp.eq.s32.totalorder %v24, 0
    %v26 = vceil.f32 %v22
    %v27 = vfloor.f32 %v22
    %v28 = vsel %vm25, %v26, %v27
    %29 = vst [vmem:[#allocation5] sm:$0x3] %v28
    // Predicated region
    $region10: #{tpu_custom_call.1} parent=1 // pred_check
      _
    $region11: #{tpu_custom_call.1} parent=1 // pred_check_branch
      %31 = sbr.rel (0) target = $region13
    $region12: #{tpu_custom_call.1} parent=1 // pred_region
      %s33 = ssub.s32 32, 32
      %34 = vsyncadd [#allocation4], %s33
      %s36 = sshll.u32 [#allocation5], 4
      %s37 = int_to_ptr.vmem [resolvable:$true] %s36
      %39 = dma.vmem_to_hbm [thread:$0]  %s37, 32, %s1, [#allocation4]
    $region13: #{tpu_custom_call.1} parent=1 // pred_fallthru
      _
    // Predicated region
    $region14: #{tpu_custom_call.1} parent=1 // pred_check
      _
    $region15: #{tpu_custom_call.1} parent=1 // pred_check_branch
      %41 = sbr.rel (0) target = $region17
    $region16: #{tpu_custom_call.1} parent=1 // pred_region
      %42 = dma.done [#allocation4], 32
    $region17: #{tpu_custom_call.1} parent=1 // pred_fallthru
      _
    %43 = vsyncpa [#allocation3], 1
    %44 = vsyncpa [#allocation4], 1

</llo_original>
